<compile_context>
chip_gen: v7x
topology: tpu7x:2x2x1
jax: 0.10.0
libtpu: 0.0.40
codegen_flags: <defaults>
</compile_context>

<pallas_src>
import jax
import jax.numpy as jnp
from jax.experimental import pallas as pl
from jax.experimental.pallas import tpu as pltpu


def _round_up(x, m):
    return (x + m - 1) // m * m


def _floor_mult(x, m):
    return (x // m) * m


def _vmem_budget_bytes():
    """Per-generation scoped-VMEM budget: 75% of per-core VMEM capacity."""
    cap = 64 << 20  # conservative default == v7x per-core physical VMEM
    try:
        info = pltpu.get_tpu_info()
        cap = int(getattr(info, "vmem_capacity_bytes", cap) or cap)
    except Exception:
        pass
    cap = max(32 << 20, min(cap, 128 << 20))
    return (cap * 3) // 4


def _resident_spec(block_shape, index_map, nbytes):
    """BlockSpec for a grid-invariant operand.

    Large operands are single-buffered (their index_map is constant so they
    are DMA'd exactly once and the second buffer is pure VMEM waste); small
    operands keep the default for maximum compatibility.  Returns
    (spec, buffer_count) so the caller can budget VMEM accurately.
    """
    if nbytes >= (4 << 20):
        try:
            return pl.BlockSpec(block_shape, index_map,
                                pipeline_mode=pl.Buffered(1)), 1
        except Exception:  # pipeline_mode/Buffered unavailable -> default
            pass
    return pl.BlockSpec(block_shape, index_map), 2


def _legal_tm(tm, M, align=8):
    """Clamp a row tile so the block shape is always legal on TPU."""
    if M <= align:
        return max(1, M)            # block dim == full array dim
    return max(align, _floor_mult(min(tm, M), align))


def _choose_tm(M, t_cols, in_isz, out_isz, resident_vmem, budget,
               *, target_hbm_tile=1 << 20, cap=8192, align=8):
    """Pick the M tile: ~1 MiB HBM tiles, >=2 grid steps when M allows,
    shrink only if the double-buffered tiles would not fit the VMEM budget."""
    if M <= align:
        return max(1, M)
    hbm_row = max(1, t_cols * in_isz)
    tm = max(align, min(cap, _floor_mult(target_hbm_tile // hbm_row, align)))
    # Prefer >= 2 grid steps (v7x megacore + pipeline overlap), but never
    # shrink the HBM tile below ~256 KiB just to get them.
    two_step = _round_up(pl.cdiv(M, 2), align)
    min_rows = max(align, _round_up((256 << 10) // hbm_row, align))
    tm = min(tm, max(two_step, min_rows))
    tm = _legal_tm(tm, M, align)
    # Shrink while the double-buffered in/out tiles + resident operands
    # exceed the budget (VMEM rows are lane-padded to 128).
    vmem_row = _round_up(t_cols, 128) * (in_isz + out_isz) * 2
    while tm > align and resident_vmem + tm * vmem_row > budget:
        tm = _legal_tm(max(align, tm // 2), M, align)
    return tm


# ---------------------------------------------------------------------------
# Kernels
# ---------------------------------------------------------------------------
def _triu_fused_kernel(x_ref, w_ref, b_ref, o_ref):
    # x: (TM, T), w: (T, T) upper-triangular (VMEM-resident), b: (1, T).
    acc = jnp.dot(x_ref[...], w_ref[...], preferred_element_type=jnp.float32)
    o_ref[...] = (acc + b_ref[...].astype(jnp.float32)).astype(o_ref.dtype)


def _triu_tiled_kernel(x_ref, w_ref, b_ref, o_ref, acc_ref):
    # Grid (M blocks, N blocks, K blocks); K innermost ("arbitrary").
    n = pl.program_id(1)
    k = pl.program_id(2)

    @pl.when(k == 0)
    def _init():
        acc_ref[...] = jnp.zeros_like(acc_ref)

    # W_ut is upper-triangular: block (k, n) is identically zero for k > n,
    # so skip the MXU pass (its DMA is already avoided by the clamped
    # index_map, which keeps pointing at an already-fetched block).
    @pl.when(k <= n)
    def _accumulate():
        acc_ref[...] += jnp.dot(x_ref[...], w_ref[...],
                                preferred_element_type=jnp.float32)

    @pl.when(k == pl.num_programs(2) - 1)
    def _finalize():
        o_ref[...] = (acc_ref[...]
                      + b_ref[...].astype(jnp.float32)).astype(o_ref.dtype)


# ---------------------------------------------------------------------------
# Wrapper
# ---------------------------------------------------------------------------
def triu_forward(inputs, w_ut, bias, *, tm=None, tile_t=256,
                 force_tiled=False, out_dtype=None):
    """inputs: (B, C, T); w_ut: (T, T) upper-triangular; bias: (T,)."""
    B, C, T = inputs.shape
    M = B * C
    out_dtype = jnp.dtype(out_dtype or inputs.dtype)
    x2d = inputs.reshape(M, T)                    # metadata-only reshape
    b2 = bias.reshape(1, T)
    in_isz = x2d.dtype.itemsize
    out_isz = out_dtype.itemsize
    w_isz = w_ut.dtype.itemsize

    budget = _vmem_budget_bytes()
    cost = pl.CostEstimate(
        flops=int(M * T * (T + 1)),               # triangular matmul
        transcendentals=0,
        bytes_accessed=int(in_isz * M * T + out_isz * M * T
                           + w_isz * T * T // 2 + 4 * T),
    )

    # ----- fast path: whole upper-triangular weight stays VMEM-resident -----
    w_spec, w_nbuf = _resident_spec((T, T), lambda i: (0, 0), T * T * w_isz)
    b_spec, b_nbuf = _resident_spec((1, T), lambda i: (0, 0),
                                    _round_up(T, 128) * b2.dtype.itemsize)
    resident = (_round_up(T, 8) * _round_up(T, 128) * w_isz * w_nbuf
                + 8 * _round_up(T, 128) * b2.dtype.itemsize * b_nbuf)
    vmem_row = _round_up(T, 128) * (in_isz + out_isz) * 2
    fast_fits = resident + 8 * vmem_row <= budget
    use_tiled = (not fast_fits) or (force_tiled and T >= 128)

    if not use_tiled:
        tm_ = _legal_tm(tm or _choose_tm(M, T, in_isz, out_isz,
                                         resident, budget), M)
        need = resident + tm_ * vmem_row
        out = pl.pallas_call(
            _triu_fused_kernel,
            out_shape=jax.ShapeDtypeStruct((M, T), out_dtype),
            grid=(pl.cdiv(M, tm_),),
            in_specs=[pl.BlockSpec((tm_, T), lambda i: (i, 0)), w_spec, b_spec],
            out_specs=pl.BlockSpec((tm_, T), lambda i: (i, 0)),
            compiler_params=pltpu.CompilerParams(
                dimension_semantics=("parallel",),
                vmem_limit_bytes=int(min(budget,
                                         max(need + (8 << 20), 16 << 20))),
            ),
            cost_estimate=cost,
        )(x2d, w_ut, b2)
        return out.reshape(B, C, T)

    # ----- K/N-tiled path: weight streamed block-by-block, f32 accumulator --
    tt = max(128, _round_up(min(tile_t, _round_up(T, 128)), 128))
    Tk = _round_up(T, tt)
    if Tk != T:
        # Zero-pad the contraction axis so masked K-edge blocks cannot leak
        # garbage into valid output columns (N edges are handled by masked
        # writes and need no padding).
        x2d = jnp.pad(x2d, ((0, 0), (0, Tk - T)))
        w_ut = jnp.pad(w_ut, ((0, Tk - T), (0, 0)))
    kt = Tk // tt
    nt = pl.cdiv(T, tt)

    def need_bytes(tm_):
        return (2 * tm_ * tt * in_isz            # x tiles, double-buffered
                + 2 * tm_ * tt * out_isz         # out tiles, double-buffered
                + tm_ * tt * 4                   # f32 accumulator
                + 2 * tt * tt * w_isz            # weight tiles
                + 2 * 8 * tt * b2.dtype.itemsize)

    tm_ = _legal_tm(tm or min(2048, M), M)
    while tm_ > 8 and need_bytes(tm_) > budget:
        tm_ = _legal_tm(max(8, tm_ // 2), M)

    out = pl.pallas_call(
        _triu_tiled_kernel,
        out_shape=jax.ShapeDtypeStruct((M, T), out_dtype),
        grid=(pl.cdiv(M, tm_), nt, kt),
        in_specs=[
            pl.BlockSpec((tm_, tt), lambda i, n, k: (i, jnp.minimum(k, n))),
            pl.BlockSpec((tt, tt), lambda i, n, k: (jnp.minimum(k, n), n)),
            pl.BlockSpec((1, tt), lambda i, n, k: (0, n)),
        ],
        out_specs=pl.BlockSpec((tm_, tt), lambda i, n, k: (i, n)),
        scratch_shapes=[pltpu.VMEM((tm_, tt), jnp.float32)],
        compiler_params=pltpu.CompilerParams(
            dimension_semantics=("parallel", "parallel", "arbitrary"),
            vmem_limit_bytes=int(min(budget,
                                     max(need_bytes(tm_) + (8 << 20),
                                         16 << 20))),
        ),
        cost_estimate=cost,
    )(x2d, w_ut, b2)
    return out.reshape(B, C, T)


# ---------------------------------------------------------------------------
# Params + reference
# ---------------------------------------------------------------------------
def make_params(key, time_step):
    """Deterministic synthetic params matching ParameterList([Linear(i+1, 1)])."""
    kw, kb = jax.random.split(key)
    w_full = jax.random.normal(kw, (time_step, time_step), dtype=jnp.float32) * 0.1
    w_ut = jnp.triu(w_full)        # [j, i] = weight Linear_i applies to input j
    bias = jax.random.normal(kb, (time_step,), dtype=jnp.float32) * 0.1
    return w_ut, bias


def triu_reference(inputs, w_ut, bias):
    """Pure-JAX reference reproducing the PyTorch per-timestep loop."""
    B, C, T = inputs.shape
    x = inputs.astype(jnp.float32)
    outs = []
    for i in range(T):
        w_i = w_ut[: i + 1, i].astype(jnp.float32)
        outs.append(jnp.einsum("bcj,j->bc", x[:, :, : i + 1], w_i)
                    + bias[i].astype(jnp.float32))
    return jnp.stack(outs, axis=-1)


if __name__ == "__main__":
    key = jax.random.PRNGKey(0)
    k1, k2, k3, k4, k5, k6 = jax.random.split(key, 6)

    # Case 1: module-sized small shapes (time_step=8), f32, fused fast path.
    B, C, T = 2, 4, 8
    x = jax.random.normal(k1, (B, C, T), dtype=jnp.float32)
    w_ut, bias = make_params(k2, T)
    out = jax.block_until_ready(triu_forward(x, w_ut, bias))
    ref = triu_reference(x, w_ut, bias)
    assert out.shape == (B, C, T) and out.dtype == x.dtype
    assert jnp.allclose(out, ref, atol=1e-5, rtol=1e-5)

    # Case 2: bf16 inputs stay bf16 end-to-end (f32 accumulation on the MXU).
    x_bf = x.astype(jnp.bfloat16)
    w_bf = w_ut.astype(jnp.bfloat16)
    out_bf = jax.block_until_ready(triu_forward(x_bf, w_bf, bias))
    ref_bf = triu_reference(x_bf, w_bf, bias)
    assert out_bf.dtype == jnp.bfloat16
    assert jnp.allclose(out_bf.astype(jnp.float32), ref_bf, atol=2e-2, rtol=2e-2)

    # Case 3: ragged M (= B*C = 15) exercises the cdiv grid + masked edge block
    # (no wrapper-side padding/slicing) on the row path at T = 128.
    B3, C3, T3 = 3, 5, 128
    x3 = jax.random.normal(k3, (B3, C3, T3), dtype=jnp.float32)
    w3, b3 = make_params(k4, T3)
    out3 = jax.block_until_ready(triu_forward(x3, w3, b3))
    ref3 = triu_reference(x3, w3, b3)
    assert out3.shape == (B3, C3, T3)
    assert jnp.allclose(out3, ref3, atol=1e-4, rtol=1e-4)

    # Case 4: force the K/N-tiled large-T path (triangular block skip, f32
    # accumulator, zero-padded K edge) with T not a multiple of the tile.
    B4, C4, T4 = 2, 4, 192
    x4 = jax.random.normal(k5, (B4, C4, T4), dtype=jnp.float32)
    w4, b4 = make_params(k6, T4)
    out4 = jax.block_until_ready(
        triu_forward(x4, w4, b4, force_tiled=True, tile_t=128))
    ref4 = triu_reference(x4, w4, b4)
    assert out4.shape == (B4, C4, T4)
    assert jnp.allclose(out4, ref4, atol=1e-4, rtol=1e-4)

    print("KERNEL_OK")
</pallas_src>

<mosaic_0001>
module attributes {stable_mosaic.version = 11 : i64} {
  func.func @_triu_fused_kernel(%arg0: i32, %arg1: memref<8x8xf32, #tpu.memory_space<vmem>>, %arg2: memref<8x8xf32, #tpu.memory_space<vmem>>, %arg3: memref<1x8xf32, #tpu.memory_space<vmem>>, %arg4: memref<8x8xf32, #tpu.memory_space<vmem>>) attributes {dimension_semantics = [#tpu.dimension_semantics<parallel>], iteration_bounds = array<i64: 1>, scalar_prefetch = 0 : i64, scratch_operands = 0 : i64, tpu.core_type = #tpu.core_type<tc>, window_params = [{transform_indices = @transform_0, window_bounds = array<i64: 8, 8>}, {pipeline_mode = #tpu.pipeline_mode<synchronous>, transform_indices = @transform_1, window_bounds = array<i64: 8, 8>}, {pipeline_mode = #tpu.pipeline_mode<synchronous>, transform_indices = @transform_2, window_bounds = array<i64: 1, 8>}, {transform_indices = @transform_3, window_bounds = array<i64: 8, 8>}]} {
    %c0 = arith.constant 0 : index
    %c0_0 = arith.constant 0 : index
    %0 = vector.load %arg1[%c0, %c0_0] : memref<8x8xf32, #tpu.memory_space<vmem>>, vector<8x8xf32>
    %c0_1 = arith.constant 0 : index
    %c0_2 = arith.constant 0 : index
    %1 = vector.load %arg2[%c0_1, %c0_2] : memref<8x8xf32, #tpu.memory_space<vmem>>, vector<8x8xf32>
    %cst = arith.constant dense<0.000000e+00> : vector<8x8xf32>
    %2 = tpu.matmul %0, %1, %cst {dimension_numbers = #tpu.dot_dimension_numbers<[1], [0], [0], [1], [0, 0, 1, 1], [], []>} : vector<8x8xf32>, vector<8x8xf32>, vector<8x8xf32> -> vector<8x8xf32>
    %c0_3 = arith.constant 0 : index
    %c0_4 = arith.constant 0 : index
    %3 = vector.load %arg3[%c0_3, %c0_4] : memref<1x8xf32, #tpu.memory_space<vmem>>, vector<1x8xf32>
    %4 = vector.broadcast %3 : vector<1x8xf32> to vector<8x8xf32>
    %5 = arith.addf %2, %4 : vector<8x8xf32>
    %c0_5 = arith.constant 0 : index
    %c0_6 = arith.constant 0 : index
    %6 = vector.load %arg4[%c0_5, %c0_6] : memref<8x8xf32, #tpu.memory_space<vmem>>, vector<8x8xf32>
    tpu.vector_store %arg4[%c0_5, %c0_6], %5 {strides = array<i32>} : memref<8x8xf32, #tpu.memory_space<vmem>>, vector<8x8xf32>,
    return
  }
  func.func @transform_0(%arg0: i32) -> (i32, i32) {
    %c0_i32 = arith.constant 0 : i32
    %c0_i32_0 = arith.constant 0 : i32
    return %arg0, %c0_i32 : i32, i32
  }
  func.func @transform_1(%arg0: i32) -> (i32, i32) {
    %c0_i32 = arith.constant 0 : i32
    %c0_i32_0 = arith.constant 0 : i32
    %c0_i32_1 = arith.constant 0 : i32
    return %c0_i32, %c0_i32_0 : i32, i32
  }
  func.func @transform_2(%arg0: i32) -> (i32, i32) {
    %c0_i32 = arith.constant 0 : i32
    %c0_i32_0 = arith.constant 0 : i32
    %c0_i32_1 = arith.constant 0 : i32
    return %c0_i32, %c0_i32_0 : i32, i32
  }
  func.func @transform_3(%arg0: i32) -> (i32, i32) {
    %c0_i32 = arith.constant 0 : i32
    %c0_i32_0 = arith.constant 0 : i32
    return %arg0, %c0_i32 : i32, i32
  }
}

</mosaic_0001>

<llo_original>
// kernel: tpu_custom_call.1
$region0: #{tpu_custom_call.1}
  #allocation0 [shape = 'u32[]', space=smem, size = 0x4, offset = 0x4, fixed_abs, tag = 'smem constant byte address 0x4 - core index']
  #allocation1 [shape = 'u32[144,128]{1,0:T(1,128)}', space=vmem, size = 0x12000, scoped, tag = 'internal scratch']
  %s0 = inlined_call_operand.hbm [shape: f32[8,8], index: 0, kind: input, shape index: {}]
  %s1 = inlined_call_operand.hbm [shape: f32[8,8], index: 1, kind: input, shape index: {}]
  %s2 = inlined_call_operand.vmem [shape: f32[1,8], index: 2, kind: input, shape index: {}]
  %s3 = inlined_call_operand.hbm [shape: f32[8,8], index: 3, kind: output, shape index: {}]
  %s4 = sld [smem:[#allocation0]]
  $region30: #{tpu_custom_call.1} parent=0
    _
  %s6 = ssub.s32 1, %s4
  %s7 = scalar_select 0, %s6, %s4
  $region1: #{tpu_custom_call.1} parent=0
    #allocation2 [shape = 'u8[4096]{0}', space=vmem, size = 0x1000, scoped, tag = 'input window, operand 0, single buffered']
    #allocation3 [shape = 's32[1]{0}', space=sflag, size = 0x4, scoped, tag = 'scoped memory for tpu_custom_call.1']
    #allocation4 [shape = 's32[1]{0}', space=sflag, size = 0x4, scoped, tag = 'scoped memory for tpu_custom_call.1']
    #allocation5 [shape = 'u8[4096]{0}', space=vmem, size = 0x1000, scoped, tag = 'input window, operand 1, single buffered']
    #allocation6 [shape = 's32[1]{0}', space=sflag, size = 0x4, scoped, tag = 'scoped memory for tpu_custom_call.1']
    #allocation7 [shape = 'u8[4096]{0}', space=vmem, size = 0x1000, scoped, tag = 'output window, operand 0, single buffered']
    %8 = vsyncpa [#allocation3], 0
    %9 = vsyncpa [#allocation6], 0
    %10 = vsyncpa [#allocation4], 0
    // Predicated region
    $region2: #{tpu_custom_call.1} parent=1 // pred_check
      _
    $region3: #{tpu_custom_call.1} parent=1 // pred_check_branch
      %12 = sbr.rel (0) target = $region5
    $region4: #{tpu_custom_call.1} parent=1 // pred_region
      %s14 = ssub.s32 128, 128
      %15 = vsyncadd [#allocation3], %s14
      %s17 = sshll.u32 [#allocation2], 4
      %s18 = int_to_ptr.vmem [resolvable:$true] %s17
      %20 = dma.hbm_to_vmem [thread:$0]  %s0, 128, %s18, [#allocation3]
    $region5: #{tpu_custom_call.1} parent=1 // pred_fallthru
      _
    // Predicated region
    $region6: #{tpu_custom_call.1} parent=1 // pred_check
      _
    $region7: #{tpu_custom_call.1} parent=1 // pred_check_branch
      %22 = sbr.rel (0) target = $region9
    $region8: #{tpu_custom_call.1} parent=1 // pred_region
      %s24 = ssub.s32 128, 128
      %25 = vsyncadd [#allocation6], %s24
      %s27 = sshll.u32 [#allocation5], 4
      %s28 = int_to_ptr.vmem [resolvable:$true] %s27
      %30 = dma.hbm_to_vmem [thread:$0]  %s1, 128, %s28, [#allocation6]
    $region9: #{tpu_custom_call.1} parent=1 // pred_fallthru
      _
    // Predicated region
    $region10: #{tpu_custom_call.1} parent=1 // pred_check
      _
    $region11: #{tpu_custom_call.1} parent=1 // pred_check_branch
      %32 = sbr.rel (0) target = $region13
    $region12: #{tpu_custom_call.1} parent=1 // pred_region
      _
    $region13: #{tpu_custom_call.1} parent=1 // pred_fallthru
      _
    // Predicated region
    $region14: #{tpu_custom_call.1} parent=1 // pred_check
      _
    $region15: #{tpu_custom_call.1} parent=1 // pred_check_branch
      %34 = sbr.rel (0) target = $region17
    $region16: #{tpu_custom_call.1} parent=1 // pred_region
      %35 = dma.done [#allocation3], 128
    $region17: #{tpu_custom_call.1} parent=1 // pred_fallthru
      _
    // Predicated region
    $region18: #{tpu_custom_call.1} parent=1 // pred_check
      _
    $region19: #{tpu_custom_call.1} parent=1 // pred_check_branch
      %37 = sbr.rel (0) target = $region21
    $region20: #{tpu_custom_call.1} parent=1 // pred_region
      %38 = dma.done [#allocation6], 128
    $region21: #{tpu_custom_call.1} parent=1 // pred_fallthru
      _
    %v39 = vld [vmem:[#allocation2] sm:$0xff]
    %v40 = vld [vmem:[#allocation5] sm:$0xff]
    %v41 = vld [vmem:[%s2] sm:$0x1]
    %v43 = vlaneseq
    %v44 = vshrl.u32 %v43, 7
    %v45 = vsub.s32 0, %v44
    %v46 = vrot.slane %v41, %v45
    %vm48 = vcmask 64512
    %v50 = vsel %vm48, %v39, 0
    %52 = vmatprep.subr.mxu0 0.0
    %53 = vmatpush1.msra.mxu0 %v40
    %54 = vmatprep.subr.mxu0 0.0
    %55 = vmatpush1.msra.mxu0 0.0
    %56 = vmatprep.subr.mxu0 0.0
    %57 = vmatpush1.msra.mxu0 0.0
    %58 = vmatprep.subr.mxu0 0.0
    %59 = vmatpush1.msra.mxu0 0.0
    %60 = vmatprep.subr.mxu0 0.0
    %61 = vmatpush1.msra.mxu0 0.0
    %62 = vmatprep.subr.mxu0 0.0
    %63 = vmatpush1.msra.mxu0 0.0
    %64 = vmatprep.subr.mxu0 0.0
    %65 = vmatpush1.msra.mxu0 0.0
    %66 = vmatprep.subr.mxu0 0.0
    %67 = vmatpush1.msra.mxu0 0.0
    %68 = vmatprep.subr.mxu0 0.0
    %69 = vmatpush1.msra.mxu0 0.0
    %70 = vmatprep.subr.mxu0 0.0
    %71 = vmatpush1.msra.mxu0 0.0
    %72 = vmatprep.subr.mxu0 0.0
    %73 = vmatpush1.msra.mxu0 0.0
    %74 = vmatprep.subr.mxu0 0.0
    %75 = vmatpush1.msra.mxu0 0.0
    %76 = vmatprep.subr.mxu0 0.0
    %77 = vmatpush1.msra.mxu0 0.0
    %78 = vmatprep.subr.mxu0 0.0
    %79 = vmatpush1.msra.mxu0 0.0
    %80 = vmatprep.subr.mxu0 0.0
    %81 = vmatpush1.msra.mxu0 0.0
    %82 = vmatprep.subr.mxu0 0.0
    %83 = vmatpush1.msra.mxu0 0.0
    %84 = vmatprep.subr.mxu0 0.0
    %85 = vmatpush1.msra.mxu0 0.0
    %86 = vmatprep.subr.mxu0 0.0
    %87 = vmatpush1.msra.mxu0 0.0
    %88 = vmatprep.subr.mxu0 0.0
    %89 = vmatpush1.msra.mxu0 0.0
    %90 = vmatprep.subr.mxu0 0.0
    %91 = vmatpush1.msra.mxu0 0.0
    %92 = vmatprep.subr.mxu0 0.0
    %93 = vmatpush1.msra.mxu0 0.0
    %94 = vmatprep.subr.mxu0 0.0
    %95 = vmatpush1.msra.mxu0 0.0
    %96 = vmatprep.subr.mxu0 0.0
    %97 = vmatpush1.msra.mxu0 0.0
    %98 = vmatprep.subr.mxu0 0.0
    %99 = vmatpush1.msra.mxu0 0.0
    %100 = vmatprep.subr.mxu0 0.0
    %101 = vmatpush1.msra.mxu0 0.0
    %102 = vmatprep.subr.mxu0 0.0
    %103 = vmatpush1.msra.mxu0 0.0
    %104 = vmatprep.subr.mxu0 0.0
    %105 = vmatpush1.msra.mxu0 0.0
    %106 = vmatprep.subr.mxu0 0.0
    %107 = vmatpush1.msra.mxu0 0.0
    %108 = vmatprep.subr.mxu0 0.0
    %109 = vmatpush1.msra.mxu0 0.0
    %110 = vmatprep.subr.mxu0 0.0
    %111 = vmatpush1.msra.mxu0 0.0
    %112 = vmatprep.subr.mxu0 0.0
    %113 = vmatpush1.msra.mxu0 0.0
    %114 = vmatprep.subr.mxu0 0.0
    %115 = vmatpush1.msra.mxu0 0.0
    %116 = vmatprep.mubr.f32.mxu0 0.0
    %117 = vmatmul.mubr.f32.gmra.mrb[0].mxu0 %v50
    %v118 = vpop.f32.mrb[0].mxu0
    %v119 = vadd.f32 %v46, %v118
    %v120 = vpop.f32.mrb[0].mxu0
    %121 = vdwg.mxu0
    %122 = vst.msk [vmem:[#allocation7] sm:$0xff] %vm48, %v119
    // Predicated region
    $region22: #{tpu_custom_call.1} parent=1 // pred_check
      _
    $region23: #{tpu_custom_call.1} parent=1 // pred_check_branch
      %124 = sbr.rel (0) target = $region25
    $region24: #{tpu_custom_call.1} parent=1 // pred_region
      %s126 = ssub.s32 128, 128
      %127 = vsyncadd [#allocation4], %s126
      %s129 = sshll.u32 [#allocation7], 4
      %s130 = int_to_ptr.vmem [resolvable:$true] %s129
      %132 = dma.vmem_to_hbm [thread:$0]  %s130, 128, %s3, [#allocation4]
    $region25: #{tpu_custom_call.1} parent=1 // pred_fallthru
      _
    // Predicated region
    $region26: #{tpu_custom_call.1} parent=1 // pred_check
      _
    $region27: #{tpu_custom_call.1} parent=1 // pred_check_branch
      %134 = sbr.rel (0) target = $region29
    $region28: #{tpu_custom_call.1} parent=1 // pred_region
      %135 = dma.done [#allocation4], 128
    $region29: #{tpu_custom_call.1} parent=1 // pred_fallthru
      _
    %136 = vsyncpa [#allocation3], 1
    %137 = vsyncpa [#allocation6], 1
    %138 = vsyncpa [#allocation4], 1

</llo_original>
